<compile_context>
chip_gen: v7x
topology: tpu7x:2x2x1
jax: 0.10.0
libtpu: 0.0.40
codegen_flags: <defaults>
</compile_context>

<pallas_src>
import functools

import jax
import jax.numpy as jnp
from jax.experimental import pallas as pl
from jax.experimental.pallas import tpu as pltpu

LANES = 128
SUBLANES = 8
# Pad the flattened input to a multiple of 16 rows (2048 elems) so the row
# count is friendly to both f32 (8,128) and bf16 (16,128) native tiling.
ROW_ALIGN = 16
CHUNK = ROW_ALIGN * LANES          # 2048 elements
MAX_ROW_TILE = 1024                # 1024 x 128 x 4B = 512 KiB per f32 block


def _sse_kernel(x_ref, t_ref, acc_ref, *, rows, row_tile, blocks_per_split,
                need_mask):
    """Accumulate a lane-parallel partial SSE for this split into acc_ref (1,8,128)."""
    p = pl.program_id(0)          # parallel split axis (megacore on v7x)
    i = pl.program_id(1)          # sequential reduction axis

    @pl.when(i == 0)
    def _():
        acc_ref[...] = jnp.zeros_like(acc_ref)

    d = x_ref[...].astype(jnp.float32) - t_ref[...].astype(jnp.float32)
    d2 = d * d

    if need_mask:
        # Last block overhangs past `rows`: zero the invalid (garbage) rows.
        blk = p * blocks_per_split + i
        row_ids = blk * row_tile + jax.lax.broadcasted_iota(jnp.int32, d2.shape, 0)
        d2 = jnp.where(row_ids < rows, d2, 0.0)

    # (row_tile, 128) -> (row_tile//8, 8, 128) is a tile-aligned split; the
    # axis-0 sum is pure VPU vreg adds (no XLU, no scalar path).
    partial = d2.reshape(row_tile // SUBLANES, SUBLANES, LANES).sum(axis=0)
    acc_ref[...] += partial[None]


def _as_lane_rows(a):
    """View `a` as (rows, 128) in its ORIGINAL dtype; rows is a multiple of 16."""
    flat = a.reshape(-1)
    pad = (-flat.size) % CHUNK
    if pad:
        # Only for sizes not divisible by 2048 elements (a copy; padded zeros
        # contribute 0 to the SSE since both x and target get the same pad).
        flat = jnp.pad(flat, (0, pad))
    return flat.reshape(-1, LANES)


@jax.jit
def content_loss_forward(x, target, content_weight):
    """Returns (loss, x): loss = mse(x, target) * content_weight; x unchanged."""
    assert x.shape == target.shape, "input/target shape mismatch"
    n_elems = x.size

    xf = _as_lane_rows(x)
    tf = _as_lane_rows(target)
    rows = xf.shape[0]                         # multiple of 16 by construction

    row_tile = min(MAX_ROW_TILE, rows)         # multiple of 16
    total_blocks = pl.cdiv(rows, row_tile)
    need_mask = (rows % row_tile) != 0

    # Split the reduction across two cores (v7x megacore) when it tiles evenly.
    num_splits = 2 if (total_blocks >= 2 and total_blocks % 2 == 0) else 1
    blocks_per_split = total_blocks // num_splits

    kernel = functools.partial(
        _sse_kernel,
        rows=rows,
        row_tile=row_tile,
        blocks_per_split=blocks_per_split,
        need_mask=need_mask,
    )

    def in_map(p, i):
        return (p * blocks_per_split + i, 0)

    partials = pl.pallas_call(
        kernel,
        out_shape=jax.ShapeDtypeStruct((num_splits, SUBLANES, LANES), jnp.float32),
        grid_spec=pltpu.PrefetchScalarGridSpec(
            num_scalar_prefetch=0,
            grid=(num_splits, blocks_per_split),
            in_specs=[
                pl.BlockSpec((row_tile, LANES), in_map),
                pl.BlockSpec((row_tile, LANES), in_map),
            ],
            out_specs=pl.BlockSpec((1, SUBLANES, LANES), lambda p, i: (p, 0, 0)),
        ),
        compiler_params=pltpu.CompilerParams(
            dimension_semantics=("parallel", "arbitrary"),
        ),
    )(xf, tf)

    sse = jnp.sum(partials)                    # tiny final collapse in JAX
    loss = (sse / jnp.float32(n_elems)) * jnp.asarray(content_weight, jnp.float32)
    return loss, x                             # module returns `input` unchanged


if __name__ == "__main__":
    key = jax.random.PRNGKey(0)
    content_weight = 5.0

    def check(idx, shape, dtype=jnp.float32, rtol=2e-5, atol=1e-5):
        k1, k2 = jax.random.split(jax.random.fold_in(key, idx))
        x = jax.random.normal(k1, shape, dtype=dtype)
        t = jax.random.normal(k2, shape, dtype=dtype)
        loss, out = content_loss_forward(x, t, content_weight)
        jax.block_until_ready((loss, out))
        ref = jnp.mean((x.astype(jnp.float32) - t.astype(jnp.float32)) ** 2) * content_weight
        assert out.shape == x.shape and out.dtype == x.dtype
        assert jnp.allclose(out, x), "pass-through output mismatch"
        assert jnp.allclose(loss, ref, rtol=rtol, atol=atol), (shape, loss, ref)

    # Primary small test, NCHW conv-activation layout.
    check(0, (2, 4, 16, 16))
    # Multi-block path exercising the 2-way parallel split (2 blocks, no mask).
    check(1, (4, 16, 64, 64))
    # Ragged path exercising wrapper padding + in-kernel tail-row mask + split.
    check(2, (1, 3, 211, 211))

    print("KERNEL_OK")
</pallas_src>

<mosaic_0001>
module attributes {stable_mosaic.version = 11 : i64} {
  func.func @_sse_kernel(%arg0: i32, %arg1: i32, %arg2: memref<16x128xf32, #tpu.memory_space<vmem>>, %arg3: memref<16x128xf32, #tpu.memory_space<vmem>>, %arg4: memref<1x8x128xf32, #tpu.memory_space<vmem>>) attributes {dimension_semantics = [#tpu.dimension_semantics<parallel>, #tpu.dimension_semantics<arbitrary>], iteration_bounds = array<i64: 1, 1>, scalar_prefetch = 0 : i64, scratch_operands = 0 : i64, tpu.core_type = #tpu.core_type<tc>, window_params = [{transform_indices = @transform_0, window_bounds = array<i64: 16, 128>}, {transform_indices = @transform_1, window_bounds = array<i64: 16, 128>}, {transform_indices = @transform_2, window_bounds = array<i64: 1, 8, 128>}]} {
    %c0_i32 = arith.constant 0 : i32
    %0 = arith.cmpi eq, %arg1, %c0_i32 : i32
    %1 = arith.extui %0 : i1 to i32
    %c0_i32_0 = arith.constant 0 : i32
    %2 = arith.cmpi ne, %1, %c0_i32_0 : i32
    scf.if %2 {
      %cst_10 = arith.constant 0.000000e+00 : f32
      %13 = vector.broadcast %cst_10 : f32 to vector<1x8x128xf32>
      %c0_11 = arith.constant 0 : index
      %c0_12 = arith.constant 0 : index
      %c0_13 = arith.constant 0 : index
      %14 = vector.load %arg4[%c0_11, %c0_12, %c0_13] : memref<1x8x128xf32, #tpu.memory_space<vmem>>, vector<1x8x128xf32>
      tpu.vector_store %arg4[%c0_11, %c0_12, %c0_13], %13 {strides = array<i32>} : memref<1x8x128xf32, #tpu.memory_space<vmem>>, vector<1x8x128xf32>,
    } else {
    }
    %c0 = arith.constant 0 : index
    %c0_1 = arith.constant 0 : index
    %3 = vector.load %arg2[%c0, %c0_1] : memref<16x128xf32, #tpu.memory_space<vmem>>, vector<16x128xf32>
    %c0_2 = arith.constant 0 : index
    %c0_3 = arith.constant 0 : index
    %4 = vector.load %arg3[%c0_2, %c0_3] : memref<16x128xf32, #tpu.memory_space<vmem>>, vector<16x128xf32>
    %5 = arith.subf %3, %4 : vector<16x128xf32>
    %6 = arith.mulf %5, %5 : vector<16x128xf32>
    %7 = vector.shape_cast %6 : vector<16x128xf32> to vector<2x8x128xf32>
    %cst = arith.constant dense<0.000000e+00> : vector<8x128xf32>
    %8 = vector.multi_reduction <add>, %7, %cst [0] : vector<2x8x128xf32> to vector<8x128xf32>
    %c0_4 = arith.constant 0 : index
    %c0_5 = arith.constant 0 : index
    %c0_6 = arith.constant 0 : index
    %9 = vector.load %arg4[%c0_4, %c0_5, %c0_6] : memref<1x8x128xf32, #tpu.memory_space<vmem>>, vector<1x8x128xf32>
    %10 = vector.shape_cast %8 : vector<8x128xf32> to vector<1x8x128xf32>
    %11 = arith.addf %9, %10 : vector<1x8x128xf32>
    %c0_7 = arith.constant 0 : index
    %c0_8 = arith.constant 0 : index
    %c0_9 = arith.constant 0 : index
    %12 = vector.load %arg4[%c0_7, %c0_8, %c0_9] : memref<1x8x128xf32, #tpu.memory_space<vmem>>, vector<1x8x128xf32>
    tpu.vector_store %arg4[%c0_7, %c0_8, %c0_9], %11 {strides = array<i32>} : memref<1x8x128xf32, #tpu.memory_space<vmem>>, vector<1x8x128xf32>,
    return
  }
  func.func @transform_0(%arg0: i32, %arg1: i32) -> (i32, i32) {
    %c1_i32 = arith.constant 1 : i32
    %0 = arith.muli %arg0, %c1_i32 : i32
    %1 = arith.addi %0, %arg1 : i32
    %c0_i32 = arith.constant 0 : i32
    %c0_i32_0 = arith.constant 0 : i32
    return %1, %c0_i32 : i32, i32
  }
  func.func @transform_1(%arg0: i32, %arg1: i32) -> (i32, i32) {
    %c1_i32 = arith.constant 1 : i32
    %0 = arith.muli %arg0, %c1_i32 : i32
    %1 = arith.addi %0, %arg1 : i32
    %c0_i32 = arith.constant 0 : i32
    %c0_i32_0 = arith.constant 0 : i32
    return %1, %c0_i32 : i32, i32
  }
  func.func @transform_2(%arg0: i32, %arg1: i32) -> (i32, i32, i32) {
    %c0_i32 = arith.constant 0 : i32
    %c0_i32_0 = arith.constant 0 : i32
    %c0_i32_1 = arith.constant 0 : i32
    return %arg0, %c0_i32, %c0_i32_0 : i32, i32, i32
  }
}

</mosaic_0001>

<llo_original>
// kernel: content_loss_forward.1
$region0: #{content_loss_forward.1}
  #allocation0 [shape = 'u32[]', space=smem, size = 0x4, offset = 0x4, fixed_abs, tag = 'smem constant byte address 0x4 - core index']
  #allocation1 [shape = 'u32[144,128]{1,0:T(1,128)}', space=vmem, size = 0x12000, scoped, tag = 'internal scratch']
  %s0 = inlined_call_operand.vmem [shape: f32[16,128], index: 0, kind: input, shape index: {}]
  %s1 = inlined_call_operand.vmem [shape: f32[16,128], index: 1, kind: input, shape index: {}]
  %s2 = inlined_call_operand.vmem [shape: f32[1,8,128], index: 2, kind: output, shape index: {}]
  %s3 = sld [smem:[#allocation0]]
  $region22: #{content_loss_forward.1} parent=0
    _
  %s5 = ssub.s32 1, %s3
  %s6 = scalar_select 0, %s5, %s3
  // Predicated region
  $region2: #{content_loss_forward.1} parent=0 // pred_check
    _
  $region3: #{content_loss_forward.1} parent=0 // pred_check_branch
    %8 = sbr.rel (0) target = $region5
  $region4: #{content_loss_forward.1} parent=0 // pred_region
    %s9 = sadd.s32 0, 0
    %s10 = smul.u32 2, %s9
    %p11 = scmp.lt.s32.totalorder %s10, 1
    %s12 = scalar_select %p11, %s10, 1
    %s13 = smul.addr %s12, 8
    %s14 = scalar_lea.vmem %s0, %s13
    %s15 = sadd.s32 0, 0
    %s16 = smul.u32 2, %s15
  $region5: #{content_loss_forward.1} parent=0 // pred_fallthru
    _
  // Predicated region
  $region6: #{content_loss_forward.1} parent=0 // pred_check
    _
  $region7: #{content_loss_forward.1} parent=0 // pred_check_branch
    %18 = sbr.rel (0) target = $region9
  $region8: #{content_loss_forward.1} parent=0 // pred_region
    %s19 = sadd.s32 0, 0
    %s20 = smul.u32 2, %s19
    %p21 = scmp.lt.s32.totalorder %s20, 1
    %s22 = scalar_select %p21, %s20, 1
    %s23 = smul.addr %s22, 8
    %s24 = scalar_lea.vmem %s1, %s23
    %s25 = sadd.s32 0, 0
    %s26 = smul.u32 2, %s25
  $region9: #{content_loss_forward.1} parent=0 // pred_fallthru
    _
  %s27 = sadd.s32 0, 0
  %s28 = smul.u32 2, %s27
  %p29 = scmp.lt.s32.totalorder %s28, 1
  %s30 = scalar_select %p29, %s28, 1
  %s31 = smul.addr %s30, 8
  %s32 = scalar_lea.vmem %s0, %s31
  %s33 = sadd.s32 0, 0
  %s34 = smul.u32 2, %s33
  %p35 = scmp.lt.s32.totalorder %s34, 1
  %s36 = scalar_select %p35, %s34, 1
  %s37 = smul.addr %s36, 8
  %s38 = scalar_lea.vmem %s1, %s37
  %s39 = sadd.s32 0, 0
  %s40 = smul.u32 2, %s39
  %p41 = scmp.lt.s32.totalorder %s40, 1
  %s42 = scalar_select %p41, %s40, 1
  %s43 = smul.addr %s42, 8
  %s44 = scalar_lea.vmem %s0, %s43
  %s45 = sadd.s32 0, 0
  %s46 = smul.u32 2, %s45
  %s47 = sadd.s32 0, 0
  %s48 = smul.u32 2, %s47
  %p49 = scmp.lt.s32.totalorder %s48, 1
  %s50 = scalar_select %p49, %s48, 1
  %s51 = smul.addr %s50, 8
  %s52 = scalar_lea.vmem %s1, %s51
  %s53 = sadd.s32 0, 0
  %s54 = smul.u32 2, %s53
  %p55 = scmp.eq.s32.totalorder 0, 0
  // Predicated region
  $region10: #{content_loss_forward.1} parent=0 // pred_check
    %p56 = pneg %p55
  $region11: #{content_loss_forward.1} parent=0 // pred_check_branch
    %58 = sbr.rel (%p56) target = $region13
  $region12: #{content_loss_forward.1} parent=0 // pred_region
    %59 = vst [vmem:[%s2] sm:$0xff] 0.0
  $region13: #{content_loss_forward.1} parent=0 // pred_fallthru
    _
  %v60 = vld [vmem:[%s44] sm:$0xff]
  %v61 = vld [vmem:[%s44 + $0x8] sm:$0xff]
  %v62 = vld [vmem:[%s52] sm:$0xff]
  %v63 = vld [vmem:[%s52 + $0x8] sm:$0xff]
  %v64 = vsub.f32 %v60, %v62
  %v65 = vsub.f32 %v61, %v63
  %v66 = vmul.f32 %v64, %v64
  %v67 = vmul.f32 %v65, %v65
  %v68 = vadd.f32 %v66, %v67
  %v69 = vld [vmem:[%s2] sm:$0xff]
  %v70 = vadd.f32 %v69, %v68
  %71 = vst [vmem:[%s2] sm:$0xff] %v70
  // Predicated region
  $region14: #{content_loss_forward.1} parent=0 // pred_check
    _
  $region15: #{content_loss_forward.1} parent=0 // pred_check_branch
    %73 = sbr.rel (0) target = $region17
  $region16: #{content_loss_forward.1} parent=0 // pred_region
    _
  $region17: #{content_loss_forward.1} parent=0 // pred_fallthru
    _
  // Predicated region
  $region18: #{content_loss_forward.1} parent=0 // pred_check
    _
  $region19: #{content_loss_forward.1} parent=0 // pred_check_branch
    %75 = sbr.rel (0) target = $region21
  $region20: #{content_loss_forward.1} parent=0 // pred_region
    _
  $region21: #{content_loss_forward.1} parent=0 // pred_fallthru
    _

</llo_original>
